<compile_context>
chip_gen: v5e
topology: v5e:2x2
jax: 0.10.0
libtpu: 0.0.40
codegen_flags: <defaults>
</compile_context>

<pallas_src>
import jax
import jax.numpy as jnp
from jax.experimental import pallas as pl
from jax.experimental.pallas import tpu as pltpu


# ---------------------------------------------------------------------------
# Fused kernel: ObsEncode stand-in + fc1 MLP + entity sum, TB batches / step.
# ---------------------------------------------------------------------------
def _fused_taskpred_kernel(obs_ref, task_ref, rel_ref,
                           we_o_ref, we_t_ref, be_ref,
                           w1o_ref, s_term_ref, w2_ref, b2n_ref,
                           out_ref):
    tb, n, obs_dim = obs_ref.shape
    half = s_term_ref.shape[1]

    # --- ObsEncode stand-in: per-entity linear + task conditioning + ReLU ---
    obs_flat = obs_ref[...].reshape(tb * n, obs_dim)                 # (TB*N, O)
    h = jnp.dot(obs_flat, we_o_ref[...],
                preferred_element_type=jnp.float32)                  # (TB*N, 64)
    # task term computed once per batch row (M=TB), then broadcast to entities
    tt = jnp.dot(task_ref[...], we_t_ref[...],
                 preferred_element_type=jnp.float32) + be_ref[...]   # (TB, 64)
    h = h.reshape(tb, n, 64) + tt[:, None, :]
    h = jnp.maximum(h, 0.0)

    # --- relational aggregation: feat = relation @ h (batched matmul) ---
    feat = jnp.einsum('bij,bjk->bik', rel_ref[...], h,
                      preferred_element_type=jnp.float32)            # (TB, N, 64)

    # --- fc1 first layer; skill @ W1[64:] + b1 is pre-folded into s_term ---
    h1 = jnp.dot(feat.reshape(tb * n, 64), w1o_ref[...],
                 preferred_element_type=jnp.float32)                 # (TB*N, H/2)
    h1 = h1.reshape(tb, n, half) + s_term_ref[...]
    h1 = jnp.maximum(h1, 0.0)

    # --- sum over entities BEFORE the final linear (exact rewrite) ---
    h_sum = jnp.sum(h1, axis=1)                                      # (TB, H/2)
    out_ref[...] = (jnp.dot(h_sum, w2_ref[...],
                            preferred_element_type=jnp.float32)
                    + b2n_ref[...])                                  # (TB, NUM_TASKS)


# ---------------------------------------------------------------------------
# Wrapper
# ---------------------------------------------------------------------------
def task_pred_forward(obs, relation, task, skill, params):
    B, N, obs_dim = obs.shape
    num_tasks = task.shape[1]
    half = params["w1"].shape[1]

    # Batch-invariant precompute (once per call, not once per grid step).
    w1_obs = params["w1"][:64, :]                                # (64, H/2)
    s_term = skill @ params["w1"][64:, :] + params["b1"]         # (N, H/2)
    b2n = params["b2"] * jnp.float32(N)                          # (1, NUM_TASKS)

    # Batches per grid step. Leading output dim must be a multiple of 8 (or
    # the full extent), so use TB=B when tiny, else a multiple of 8.
    if B <= 8:
        tb = B
    elif B % 64 == 0:
        tb = 64
    else:
        tb = 8
    Bp = pl.cdiv(B, tb) * tb
    if Bp != B:
        pad = Bp - B
        obs = jnp.pad(obs, ((0, pad), (0, 0), (0, 0)))
        relation = jnp.pad(relation, ((0, pad), (0, 0), (0, 0)))
        task = jnp.pad(task, ((0, pad), (0, 0)))

    out = pl.pallas_call(
        _fused_taskpred_kernel,
        out_shape=jax.ShapeDtypeStruct((Bp, num_tasks), jnp.float32),
        grid=(Bp // tb,),
        in_specs=[
            pl.BlockSpec((tb, N, obs_dim), lambda b: (b, 0, 0)),   # obs
            pl.BlockSpec((tb, num_tasks), lambda b: (b, 0)),       # task
            pl.BlockSpec((tb, N, N), lambda b: (b, 0, 0)),         # relation
            pl.BlockSpec((obs_dim, 64), lambda b: (0, 0)),         # we_o (resident)
            pl.BlockSpec((num_tasks, 64), lambda b: (0, 0)),       # we_t (resident)
            pl.BlockSpec((1, 64), lambda b: (0, 0)),               # be   (resident)
            pl.BlockSpec((64, half), lambda b: (0, 0)),            # w1_obs
            pl.BlockSpec((N, half), lambda b: (0, 0)),             # s_term
            pl.BlockSpec((half, num_tasks), lambda b: (0, 0)),     # w2
            pl.BlockSpec((1, num_tasks), lambda b: (0, 0)),        # N*b2
        ],
        out_specs=pl.BlockSpec((tb, num_tasks), lambda b: (b, 0)),
        compiler_params=pltpu.CompilerParams(
            dimension_semantics=("parallel",)),
    )(obs, task, relation,
      params["we_o"], params["we_t"], params["be"],
      w1_obs, s_term, params["w2"], b2n)

    return out if Bp == B else out[:B]


# Pure-JAX reference of the same computation (for correctness check).
def task_pred_reference(obs, relation, task, skill, params):
    h = obs @ params["we_o"] + (task @ params["we_t"])[:, None, :] + params["be"]
    h = jnp.maximum(h, 0.0)
    feat = relation @ h                                        # (B, N, 64)
    B, N, _ = feat.shape
    skill_b = jnp.broadcast_to(skill[None], (B, N, skill.shape[1]))
    x = jnp.concatenate([feat, skill_b], axis=-1)              # (B, N, hidden_dim)
    h1 = jnp.maximum(x @ params["w1"] + params["b1"], 0.0)
    y = h1 @ params["w2"] + params["b2"]                       # (B, N, num_tasks)
    return y.sum(axis=1)                                       # (B, num_tasks)


if __name__ == "__main__":
    # Small, forward-consistent shapes.
    B, N, OBS_DIM = 2, 16, 4
    LATENT_DIM, NUM_TASKS = 32, 8
    HIDDEN_DIM = 64 + LATENT_DIM       # 96
    HALF = HIDDEN_DIM // 2             # 48

    key = jax.random.PRNGKey(0)
    keys = jax.random.split(key, 10)

    obs = jax.random.normal(keys[0], (B, N, OBS_DIM), dtype=jnp.float32)
    relation = jax.random.normal(keys[1], (B, N, N), dtype=jnp.float32)
    task = jax.random.normal(keys[2], (B, NUM_TASKS), dtype=jnp.float32)
    skill = jax.random.normal(keys[3], (N, LATENT_DIM), dtype=jnp.float32)

    # Deterministic parameter init (normal(0, 0.01), zero bias — mirrors reset_para).
    params = {
        "we_o": 0.01 * jax.random.normal(keys[4], (OBS_DIM, 64), jnp.float32),
        "we_t": 0.01 * jax.random.normal(keys[5], (NUM_TASKS, 64), jnp.float32),
        "be": jnp.zeros((1, 64), jnp.float32),
        "w1": 0.01 * jax.random.normal(keys[6], (HIDDEN_DIM, HALF), jnp.float32),
        "b1": jnp.zeros((1, HALF), jnp.float32),
        "w2": 0.01 * jax.random.normal(keys[7], (HALF, NUM_TASKS), jnp.float32),
        "b2": jnp.zeros((1, NUM_TASKS), jnp.float32),
    }

    out = task_pred_forward(obs, relation, task, skill, params)
    out = jax.block_until_ready(out)

    ref = task_pred_reference(obs, relation, task, skill, params)
    assert out.shape == (B, NUM_TASKS), out.shape
    assert jnp.allclose(out, ref, atol=1e-5, rtol=1e-5), (out, ref)

    print("KERNEL_OK")
</pallas_src>

<mosaic_0001>
module attributes {stable_mosaic.version = 11 : i64} {
  func.func @_fused_taskpred_kernel(%arg0: i32, %arg1: memref<2x16x4xf32, #tpu.memory_space<vmem>>, %arg2: memref<2x8xf32, #tpu.memory_space<vmem>>, %arg3: memref<2x16x16xf32, #tpu.memory_space<vmem>>, %arg4: memref<4x64xf32, #tpu.memory_space<vmem>>, %arg5: memref<8x64xf32, #tpu.memory_space<vmem>>, %arg6: memref<1x64xf32, #tpu.memory_space<vmem>>, %arg7: memref<64x48xf32, #tpu.memory_space<vmem>>, %arg8: memref<16x48xf32, #tpu.memory_space<vmem>>, %arg9: memref<48x8xf32, #tpu.memory_space<vmem>>, %arg10: memref<1x8xf32, #tpu.memory_space<vmem>>, %arg11: memref<2x8xf32, #tpu.memory_space<vmem>>) attributes {dimension_semantics = [#tpu.dimension_semantics<parallel>], iteration_bounds = array<i64: 1>, scalar_prefetch = 0 : i64, scratch_operands = 0 : i64, tpu.core_type = #tpu.core_type<tc>, window_params = [{transform_indices = @transform_0, window_bounds = array<i64: 2, 16, 4>}, {transform_indices = @transform_1, window_bounds = array<i64: 2, 8>}, {transform_indices = @transform_2, window_bounds = array<i64: 2, 16, 16>}, {pipeline_mode = #tpu.pipeline_mode<synchronous>, transform_indices = @transform_3, window_bounds = array<i64: 4, 64>}, {pipeline_mode = #tpu.pipeline_mode<synchronous>, transform_indices = @transform_4, window_bounds = array<i64: 8, 64>}, {pipeline_mode = #tpu.pipeline_mode<synchronous>, transform_indices = @transform_5, window_bounds = array<i64: 1, 64>}, {pipeline_mode = #tpu.pipeline_mode<synchronous>, transform_indices = @transform_6, window_bounds = array<i64: 64, 48>}, {pipeline_mode = #tpu.pipeline_mode<synchronous>, transform_indices = @transform_7, window_bounds = array<i64: 16, 48>}, {pipeline_mode = #tpu.pipeline_mode<synchronous>, transform_indices = @transform_8, window_bounds = array<i64: 48, 8>}, {pipeline_mode = #tpu.pipeline_mode<synchronous>, transform_indices = @transform_9, window_bounds = array<i64: 1, 8>}, {transform_indices = @transform_10, window_bounds = array<i64: 2, 8>}]} {
    %c0 = arith.constant 0 : index
    %c0_0 = arith.constant 0 : index
    %c0_1 = arith.constant 0 : index
    %0 = vector.load %arg1[%c0, %c0_0, %c0_1] : memref<2x16x4xf32, #tpu.memory_space<vmem>>, vector<2x16x4xf32>
    %1 = vector.shape_cast %0 : vector<2x16x4xf32> to vector<32x4xf32>
    %c0_2 = arith.constant 0 : index
    %c0_3 = arith.constant 0 : index
    %2 = vector.load %arg4[%c0_2, %c0_3] : memref<4x64xf32, #tpu.memory_space<vmem>>, vector<4x64xf32>
    %cst = arith.constant dense<0.000000e+00> : vector<32x64xf32>
    %3 = tpu.matmul %1, %2, %cst {dimension_numbers = #tpu.dot_dimension_numbers<[1], [0], [0], [1], [0, 0, 1, 1], [], []>} : vector<32x4xf32>, vector<4x64xf32>, vector<32x64xf32> -> vector<32x64xf32>
    %c0_4 = arith.constant 0 : index
    %c0_5 = arith.constant 0 : index
    %4 = vector.load %arg2[%c0_4, %c0_5] : memref<2x8xf32, #tpu.memory_space<vmem>>, vector<2x8xf32>
    %c0_6 = arith.constant 0 : index
    %c0_7 = arith.constant 0 : index
    %5 = vector.load %arg5[%c0_6, %c0_7] : memref<8x64xf32, #tpu.memory_space<vmem>>, vector<8x64xf32>
    %cst_8 = arith.constant dense<0.000000e+00> : vector<2x64xf32>
    %6 = tpu.matmul %4, %5, %cst_8 {dimension_numbers = #tpu.dot_dimension_numbers<[1], [0], [0], [1], [0, 0, 1, 1], [], []>} : vector<2x8xf32>, vector<8x64xf32>, vector<2x64xf32> -> vector<2x64xf32>
    %c0_9 = arith.constant 0 : index
    %c0_10 = arith.constant 0 : index
    %7 = vector.load %arg6[%c0_9, %c0_10] : memref<1x64xf32, #tpu.memory_space<vmem>>, vector<1x64xf32>
    %8 = vector.broadcast %7 : vector<1x64xf32> to vector<2x64xf32>
    %9 = arith.addf %6, %8 : vector<2x64xf32>
    %10 = vector.shape_cast %3 : vector<32x64xf32> to vector<2x16x64xf32>
    %11 = vector.shape_cast %9 : vector<2x64xf32> to vector<2x1x64xf32>
    %12 = vector.broadcast %11 : vector<2x1x64xf32> to vector<2x16x64xf32>
    %13 = arith.addf %10, %12 : vector<2x16x64xf32>
    %cst_11 = arith.constant 0.000000e+00 : f32
    %14 = vector.broadcast %cst_11 : f32 to vector<2x16x64xf32>
    %15 = arith.maximumf %13, %14 : vector<2x16x64xf32>
    %c0_12 = arith.constant 0 : index
    %c0_13 = arith.constant 0 : index
    %c0_14 = arith.constant 0 : index
    %16 = vector.load %arg3[%c0_12, %c0_13, %c0_14] : memref<2x16x16xf32, #tpu.memory_space<vmem>>, vector<2x16x16xf32>
    "tpu.trace_start"() <{level = 10 : i32, message = "bij,bjk->bik"}> : () -> ()
    %cst_15 = arith.constant dense<0.000000e+00> : vector<2x16x64xf32>
    %17 = tpu.matmul %16, %15, %cst_15 {dimension_numbers = #tpu.dot_dimension_numbers<[2], [1], [1], [2], [0, 0, 0, 1, 1, 2], [0], [0]>} : vector<2x16x16xf32>, vector<2x16x64xf32>, vector<2x16x64xf32> -> vector<2x16x64xf32>
    "tpu.trace_stop"() : () -> ()
    %18 = vector.shape_cast %17 : vector<2x16x64xf32> to vector<32x64xf32>
    %c0_16 = arith.constant 0 : index
    %c0_17 = arith.constant 0 : index
    %19 = vector.load %arg7[%c0_16, %c0_17] : memref<64x48xf32, #tpu.memory_space<vmem>>, vector<64x48xf32>
    %cst_18 = arith.constant dense<0.000000e+00> : vector<32x48xf32>
    %20 = tpu.matmul %18, %19, %cst_18 {dimension_numbers = #tpu.dot_dimension_numbers<[1], [0], [0], [1], [0, 0, 1, 1], [], []>} : vector<32x64xf32>, vector<64x48xf32>, vector<32x48xf32> -> vector<32x48xf32>
    %21 = vector.shape_cast %20 : vector<32x48xf32> to vector<2x16x48xf32>
    %c0_19 = arith.constant 0 : index
    %c0_20 = arith.constant 0 : index
    %22 = vector.load %arg8[%c0_19, %c0_20] : memref<16x48xf32, #tpu.memory_space<vmem>>, vector<16x48xf32>
    %23 = vector.shape_cast %22 : vector<16x48xf32> to vector<1x16x48xf32>
    %24 = vector.broadcast %23 : vector<1x16x48xf32> to vector<2x16x48xf32>
    %25 = arith.addf %21, %24 : vector<2x16x48xf32>
    %cst_21 = arith.constant 0.000000e+00 : f32
    %26 = vector.broadcast %cst_21 : f32 to vector<2x16x48xf32>
    %27 = arith.maximumf %25, %26 : vector<2x16x48xf32>
    %cst_22 = arith.constant dense<0.000000e+00> : vector<2x48xf32>
    %28 = vector.multi_reduction <add>, %27, %cst_22 [1] : vector<2x16x48xf32> to vector<2x48xf32>
    %c0_23 = arith.constant 0 : index
    %c0_24 = arith.constant 0 : index
    %29 = vector.load %arg9[%c0_23, %c0_24] : memref<48x8xf32, #tpu.memory_space<vmem>>, vector<48x8xf32>
    %cst_25 = arith.constant dense<0.000000e+00> : vector<2x8xf32>
    %30 = tpu.matmul %28, %29, %cst_25 {dimension_numbers = #tpu.dot_dimension_numbers<[1], [0], [0], [1], [0, 0, 1, 1], [], []>} : vector<2x48xf32>, vector<48x8xf32>, vector<2x8xf32> -> vector<2x8xf32>
    %c0_26 = arith.constant 0 : index
    %c0_27 = arith.constant 0 : index
    %31 = vector.load %arg10[%c0_26, %c0_27] : memref<1x8xf32, #tpu.memory_space<vmem>>, vector<1x8xf32>
    %32 = vector.broadcast %31 : vector<1x8xf32> to vector<2x8xf32>
    %33 = arith.addf %30, %32 : vector<2x8xf32>
    %c0_28 = arith.constant 0 : index
    %c0_29 = arith.constant 0 : index
    %34 = vector.load %arg11[%c0_28, %c0_29] : memref<2x8xf32, #tpu.memory_space<vmem>>, vector<2x8xf32>
    tpu.vector_store %arg11[%c0_28, %c0_29], %33 {strides = array<i32>} : memref<2x8xf32, #tpu.memory_space<vmem>>, vector<2x8xf32>,
    return
  }
  func.func @transform_0(%arg0: i32) -> (i32, i32, i32) {
    %c0_i32 = arith.constant 0 : i32
    %c0_i32_0 = arith.constant 0 : i32
    %c0_i32_1 = arith.constant 0 : i32
    return %arg0, %c0_i32, %c0_i32_0 : i32, i32, i32
  }
  func.func @transform_1(%arg0: i32) -> (i32, i32) {
    %c0_i32 = arith.constant 0 : i32
    %c0_i32_0 = arith.constant 0 : i32
    return %arg0, %c0_i32 : i32, i32
  }
  func.func @transform_2(%arg0: i32) -> (i32, i32, i32) {
    %c0_i32 = arith.constant 0 : i32
    %c0_i32_0 = arith.constant 0 : i32
    %c0_i32_1 = arith.constant 0 : i32
    return %arg0, %c0_i32, %c0_i32_0 : i32, i32, i32
  }
  func.func @transform_3(%arg0: i32) -> (i32, i32) {
    %c0_i32 = arith.constant 0 : i32
    %c0_i32_0 = arith.constant 0 : i32
    %c0_i32_1 = arith.constant 0 : i32
    return %c0_i32, %c0_i32_0 : i32, i32
  }
  func.func @transform_4(%arg0: i32) -> (i32, i32) {
    %c0_i32 = arith.constant 0 : i32
    %c0_i32_0 = arith.constant 0 : i32
    %c0_i32_1 = arith.constant 0 : i32
    return %c0_i32, %c0_i32_0 : i32, i32
  }
  func.func @transform_5(%arg0: i32) -> (i32, i32) {
    %c0_i32 = arith.constant 0 : i32
    %c0_i32_0 = arith.constant 0 : i32
    %c0_i32_1 = arith.constant 0 : i32
    return %c0_i32, %c0_i32_0 : i32, i32
  }
  func.func @transform_6(%arg0: i32) -> (i32, i32) {
    %c0_i32 = arith.constant 0 : i32
    %c0_i32_0 = arith.constant 0 : i32
    %c0_i32_1 = arith.constant 0 : i32
    return %c0_i32, %c0_i32_0 : i32, i32
  }
  func.func @transform_7(%arg0: i32) -> (i32, i32) {
    %c0_i32 = arith.constant 0 : i32
    %c0_i32_0 = arith.constant 0 : i32
    %c0_i32_1 = arith.constant 0 : i32
    return %c0_i32, %c0_i32_0 : i32, i32
  }
  func.func @transform_8(%arg0: i32) -> (i32, i32) {
    %c0_i32 = arith.constant 0 : i32
    %c0_i32_0 = arith.constant 0 : i32
    %c0_i32_1 = arith.constant 0 : i32
    return %c0_i32, %c0_i32_0 : i32, i32
  }
  func.func @transform_9(%arg0: i32) -> (i32, i32) {
    %c0_i32 = arith.constant 0 : i32
    %c0_i32_0 = arith.constant 0 : i32
    %c0_i32_1 = arith.constant 0 : i32
    return %c0_i32, %c0_i32_0 : i32, i32
  }
  func.func @transform_10(%arg0: i32) -> (i32, i32) {
    %c0_i32 = arith.constant 0 : i32
    %c0_i32_0 = arith.constant 0 : i32
    return %arg0, %c0_i32 : i32, i32
  }
}

</mosaic_0001>

<llo_original>
// kernel: tpu_custom_call.1
$region0: #{tpu_custom_call.1}
  #allocation0 [shape = 'u32[]', space=smem, size = 0x4, offset = 0x4, fixed_abs, tag = 'smem constant byte address 0x4 - core index']
  #allocation1 [shape = 'u32[72,128]{1,0:T(1,128)}', space=vmem, size = 0x9000, scoped, tag = 'internal scratch']
  %s0 = inlined_call_operand.vmem [shape: f32[2,16,4], index: 0, kind: input, shape index: {}]
  %s1 = inlined_call_operand.vmem [shape: f32[2,8], index: 1, kind: input, shape index: {}]
  %s2 = inlined_call_operand.vmem [shape: f32[2,16,16], index: 2, kind: input, shape index: {}]
  %s3 = inlined_call_operand.vmem [shape: f32[4,64], index: 3, kind: input, shape index: {}]
  %s4 = inlined_call_operand.vmem [shape: f32[8,64], index: 4, kind: input, shape index: {}]
  %s5 = inlined_call_operand.vmem [shape: f32[1,64], index: 5, kind: input, shape index: {}]
  %s6 = inlined_call_operand.vmem [shape: f32[64,48], index: 6, kind: input, shape index: {}]
  %s7 = inlined_call_operand.vmem [shape: f32[16,48], index: 7, kind: input, shape index: {}]
  %s8 = inlined_call_operand.vmem [shape: f32[48,8], index: 8, kind: input, shape index: {}]
  %s9 = inlined_call_operand.vmem [shape: f32[1,8], index: 9, kind: input, shape index: {}]
  %s10 = inlined_call_operand.hbm [shape: f32[2,8], index: 10, kind: output, shape index: {}]
  %s11 = sld [smem:[#allocation0]]
  $region50: #{tpu_custom_call.1} parent=0
    _
  %s13 = ssub.s32 1, %s11
  %s14 = scalar_select 0, %s13, %s11
  $region1: #{tpu_custom_call.1} parent=0
    #allocation2 [shape = 'u8[1024]{0}', space=vmem, size = 0x400, scoped, tag = 'output window, operand 0, single buffered']
    #allocation3 [shape = 's32[1]{0}', space=sflag, size = 0x4, scoped, tag = 'scoped memory for tpu_custom_call.1']
    %15 = vsyncpa [#allocation3], 0
    // Predicated region
    $region2: #{tpu_custom_call.1} parent=1 // pred_check
      _
    $region3: #{tpu_custom_call.1} parent=1 // pred_check_branch
      %17 = sbr.rel (0) target = $region5
    $region4: #{tpu_custom_call.1} parent=1 // pred_region
      _
    $region5: #{tpu_custom_call.1} parent=1 // pred_fallthru
      _
    // Predicated region
    $region6: #{tpu_custom_call.1} parent=1 // pred_check
      _
    $region7: #{tpu_custom_call.1} parent=1 // pred_check_branch
      %19 = sbr.rel (0) target = $region9
    $region8: #{tpu_custom_call.1} parent=1 // pred_region
      _
    $region9: #{tpu_custom_call.1} parent=1 // pred_fallthru
      _
    // Predicated region
    $region10: #{tpu_custom_call.1} parent=1 // pred_check
      _
    $region11: #{tpu_custom_call.1} parent=1 // pred_check_branch
      %21 = sbr.rel (0) target = $region13
    $region12: #{tpu_custom_call.1} parent=1 // pred_region
      _
    $region13: #{tpu_custom_call.1} parent=1 // pred_fallthru
      _
    // Predicated region
    $region14: #{tpu_custom_call.1} parent=1 // pred_check
      _
    $region15: #{tpu_custom_call.1} parent=1 // pred_check_branch
      %23 = sbr.rel (0) target = $region17
    $region16: #{tpu_custom_call.1} parent=1 // pred_region
      _
    $region17: #{tpu_custom_call.1} parent=1 // pred_fallthru
      _
    // Predicated region
    $region18: #{tpu_custom_call.1} parent=1 // pred_check
      _
    $region19: #{tpu_custom_call.1} parent=1 // pred_check_branch
      %25 = sbr.rel (0) target = $region21
    $region20: #{tpu_custom_call.1} parent=1 // pred_region
      _
    $region21: #{tpu_custom_call.1} parent=1 // pred_fallthru
      _
    // Predicated region
    $region22: #{tpu_custom_call.1} parent=1 // pred_check
      _
    $region23: #{tpu_custom_call.1} parent=1 // pred_check_branch
      %27 = sbr.rel (0) target = $region25
    $region24: #{tpu_custom_call.1} parent=1 // pred_region
      _
    $region25: #{tpu_custom_call.1} parent=1 // pred_fallthru
      _
    // Predicated region
    $region26: #{tpu_custom_call.1} parent=1 // pred_check
      _
    $region27: #{tpu_custom_call.1} parent=1 // pred_check_branch
      %29 = sbr.rel (0) target = $region29
    $region28: #{tpu_custom_call.1} parent=1 // pred_region
      _
    $region29: #{tpu_custom_call.1} parent=1 // pred_fallthru
      _
    // Predicated region
    $region30: #{tpu_custom_call.1} parent=1 // pred_check
      _
    $region31: #{tpu_custom_call.1} parent=1 // pred_check_branch
      %31 = sbr.rel (0) target = $region33
    $region32: #{tpu_custom_call.1} parent=1 // pred_region
      _
    $region33: #{tpu_custom_call.1} parent=1 // pred_fallthru
      _
    // Predicated region
    $region34: #{tpu_custom_call.1} parent=1 // pred_check
      _
    $region35: #{tpu_custom_call.1} parent=1 // pred_check_branch
      %33 = sbr.rel (0) target = $region37
    $region36: #{tpu_custom_call.1} parent=1 // pred_region
      _
    $region37: #{tpu_custom_call.1} parent=1 // pred_fallthru
      _
    // Predicated region
    $region38: #{tpu_custom_call.1} parent=1 // pred_check
      _
    $region39: #{tpu_custom_call.1} parent=1 // pred_check_branch
      %35 = sbr.rel (0) target = $region41
    $region40: #{tpu_custom_call.1} parent=1 // pred_region
      _
    $region41: #{tpu_custom_call.1} parent=1 // pred_fallthru
      _
    %v36 = vld [vmem:[%s0] sm:$0xff]
    %v37 = vld [vmem:[%s0 + $0x8] sm:$0xff]
    %v38 = vld [vmem:[%s0 + $0x10] sm:$0xff]
    %v39 = vld [vmem:[%s0 + $0x18] sm:$0xff]
    %v40 = vld [vmem:[%s3] sm:$0xf]
    %vm41 = vcmask 31744
    %v43 = vsel %vm41, %v36, 0
    %v46 = vsel %vm41, %v37, 0
    %v49 = vsel %vm41, %v38, 0
    %v52 = vsel %vm41, %v39, 0
    %vm54 = vcmask 1043456
    %v56 = vsel %vm54, %v40, 0
    %58 = vmatpush.msra.mxu0 0.0
    %59 = vmatpush.msra.mxu0 0.0
    %60 = vmatpush.msra.mxu0 0.0
    %61 = vmatpush.msra.mxu0 0.0
    %62 = vmatpush.msra.mxu0 0.0
    %63 = vmatpush.msra.mxu0 0.0
    %64 = vmatpush.msra.mxu0 0.0
    %65 = vmatpush.msra.mxu0 0.0
    %66 = vmatpush.msra.mxu0 0.0
    %67 = vmatpush.msra.mxu0 0.0
    %68 = vmatpush.msra.mxu0 0.0
    %69 = vmatpush.msra.mxu0 0.0
    %70 = vmatpush.msra.mxu0 0.0
    %71 = vmatpush.msra.mxu0 0.0
    %72 = vmatpush.msra.mxu0 0.0
    %73 = vmatpush.msra.mxu0 %v56
    %74 = vmatmul.f32.gmra.mxu0 %v43
    %v75 = vpop.f32.mrf.mxu0
    %v76 = vadd.f32 0.0, %v75
    %77 = vmatmul.f32.gmra.mxu0 %v46
    %v78 = vpop.f32.mrf.mxu0
    %v79 = vadd.f32 0.0, %v78
    %80 = vmatmul.f32.gmra.mxu0 %v49
    %v81 = vpop.f32.mrf.mxu0
    %v82 = vadd.f32 0.0, %v81
    %83 = vmatmul.f32.gmra.mxu0 %v52
    %v84 = vpop.f32.mrf.mxu0
    %v85 = vadd.f32 0.0, %v84
    %86 = vdwg.mxu0
    %v87 = vld [vmem:[%s1] sm:$0x3]
    %v88 = vld [vmem:[%s4] sm:$0xff]
    %v89 = vld [vmem:[%s5] sm:$0x1]
    %v91 = vperm.slane %v89, 0
    %vm93 = vcmask 64512
    %v95 = vsel %vm93, %v87, 0
    %97 = vmatpush.msra.mxu0 0.0
    %98 = vmatpush.msra.mxu0 0.0
    %99 = vmatpush.msra.mxu0 0.0
    %100 = vmatpush.msra.mxu0 0.0
    %101 = vmatpush.msra.mxu0 0.0
    %102 = vmatpush.msra.mxu0 0.0
    %103 = vmatpush.msra.mxu0 0.0
    %104 = vmatpush.msra.mxu0 0.0
    %105 = vmatpush.msra.mxu0 0.0
    %106 = vmatpush.msra.mxu0 0.0
    %107 = vmatpush.msra.mxu0 0.0
    %108 = vmatpush.msra.mxu0 0.0
    %109 = vmatpush.msra.mxu0 0.0
    %110 = vmatpush.msra.mxu0 0.0
    %111 = vmatpush.msra.mxu0 0.0
    %112 = vmatpush.msra.mxu0 %v88
    %113 = vmatmul.f32.gmra.mxu0 %v95
    %v114 = vpop.f32.mrf.mxu0
    %v115 = vadd.f32 %v91, %v114
    %116 = vdwg.mxu0
    %v118 = vrot.slane %v115, 1
    %v119 = vperm.slane %v115, 0
    %v120 = vperm.slane %v118, 0
    %v123 = vadd.f32 %v76, %v119
    %v124 = vadd.f32 %v79, %v119
    %v125 = vadd.f32 %v82, %v120
    %v126 = vadd.f32 %v85, %v120
    %v127 = vmax.f32 %v123, 0.0
    %v128 = vmax.f32 %v124, 0.0
    %v129 = vmax.f32 %v125, 0.0
    %v130 = vmax.f32 %v126, 0.0
    %v131 = vld [vmem:[%s2] sm:$0xff]
    %v132 = vld [vmem:[%s2 + $0x8] sm:$0xff]
    %v133 = vld [vmem:[%s2 + $0x10] sm:$0xff]
    %v134 = vld [vmem:[%s2 + $0x18] sm:$0xff]
    %vm135 = vcmask 130048
    %v137 = vsel %vm135, %v131, 0
    %v140 = vsel %vm135, %v132, 0
    %142 = vmatpush.msra.mxu0 0.0
    %143 = vmatpush.msra.mxu0 0.0
    %144 = vmatpush.msra.mxu0 0.0
    %145 = vmatpush.msra.mxu0 0.0
    %146 = vmatpush.msra.mxu0 0.0
    %147 = vmatpush.msra.mxu0 0.0
    %148 = vmatpush.msra.mxu0 0.0
    %149 = vmatpush.msra.mxu0 0.0
    %150 = vmatpush.msra.mxu0 0.0
    %151 = vmatpush.msra.mxu0 0.0
    %152 = vmatpush.msra.mxu0 0.0
    %153 = vmatpush.msra.mxu0 0.0
    %154 = vmatpush.msra.mxu0 0.0
    %155 = vmatpush.msra.mxu0 0.0
    %156 = vmatpush.msra.mxu0 %v128
    %157 = vmatpush.msra.mxu0 %v127
    %158 = vmatmul.f32.gmra.mxu0 %v137
    %v159 = vpop.f32.mrf.mxu0
    %v160 = vadd.f32 0.0, %v159
    %161 = vmatmul.f32.gmra.mxu0 %v140
    %v162 = vpop.f32.mrf.mxu0
    %v163 = vadd.f32 0.0, %v162
    %164 = vdwg.mxu0
    %v166 = vsel %vm135, %v133, 0
    %v169 = vsel %vm135, %v134, 0
    %171 = vmatpush.msra.mxu0 0.0
    %172 = vmatpush.msra.mxu0 0.0
    %173 = vmatpush.msra.mxu0 0.0
    %174 = vmatpush.msra.mxu0 0.0
    %175 = vmatpush.msra.mxu0 0.0
    %176 = vmatpush.msra.mxu0 0.0
    %177 = vmatpush.msra.mxu0 0.0
    %178 = vmatpush.msra.mxu0 0.0
    %179 = vmatpush.msra.mxu0 0.0
    %180 = vmatpush.msra.mxu0 0.0
    %181 = vmatpush.msra.mxu0 0.0
    %182 = vmatpush.msra.mxu0 0.0
    %183 = vmatpush.msra.mxu0 0.0
    %184 = vmatpush.msra.mxu0 0.0
    %185 = vmatpush.msra.mxu0 %v130
    %186 = vmatpush.msra.mxu0 %v129
    %187 = vmatmul.f32.gmra.mxu0 %v166
    %v188 = vpop.f32.mrf.mxu0
    %v189 = vadd.f32 0.0, %v188
    %190 = vmatmul.f32.gmra.mxu0 %v169
    %v191 = vpop.f32.mrf.mxu0
    %v192 = vadd.f32 0.0, %v191
    %193 = vdwg.mxu0
    %v194 = vld [vmem:[%s6] sm:$0xff]
    %v195 = vld [vmem:[%s6 + $0x8] sm:$0xff]
    %v196 = vld [vmem:[%s6 + $0x10] sm:$0xff]
    %v197 = vld [vmem:[%s6 + $0x18] sm:$0xff]
    %v198 = vld [vmem:[%s6 + $0x20] sm:$0xff]
    %v199 = vld [vmem:[%s6 + $0x28] sm:$0xff]
    %v200 = vld [vmem:[%s6 + $0x30] sm:$0xff]
    %v201 = vld [vmem:[%s6 + $0x38] sm:$0xff]
    %vm202 = vcmask 523264
    %v204 = vsel %vm202, %v160, 0
    %v207 = vsel %vm202, %v163, 0
    %v210 = vsel %vm202, %v189, 0
    %v213 = vsel %vm202, %v192, 0
    %215 = vmatpush.msra.mxu0 0.0
    %216 = vmatpush.msra.mxu0 0.0
    %217 = vmatpush.msra.mxu0 0.0
    %218 = vmatpush.msra.mxu0 0.0
    %219 = vmatpush.msra.mxu0 0.0
    %220 = vmatpush.msra.mxu0 0.0
    %221 = vmatpush.msra.mxu0 0.0
    %222 = vmatpush.msra.mxu0 0.0
    %223 = vmatpush.msra.mxu0 %v201
    %224 = vmatpush.msra.mxu0 %v200
    %225 = vmatpush.msra.mxu0 %v199
    %226 = vmatpush.msra.mxu0 %v198
    %227 = vmatpush.msra.mxu0 %v197
    %228 = vmatpush.msra.mxu0 %v196
    %229 = vmatpush.msra.mxu0 %v195
    %230 = vmatpush.msra.mxu0 %v194
    %231 = vmatmul.f32.gmra.mxu0 %v204
    %v232 = vpop.f32.mrf.mxu0
    %v233 = vadd.f32 0.0, %v232
    %234 = vmatmul.f32.gmra.mxu0 %v207
    %v235 = vpop.f32.mrf.mxu0
    %v236 = vadd.f32 0.0, %v235
    %237 = vmatmul.f32.gmra.mxu0 %v210
    %v238 = vpop.f32.mrf.mxu0
    %v239 = vadd.f32 0.0, %v238
    %240 = vmatmul.f32.gmra.mxu0 %v213
    %v241 = vpop.f32.mrf.mxu0
    %v242 = vadd.f32 0.0, %v241
    %243 = vdwg.mxu0
    %v244 = vld [vmem:[%s7] sm:$0xff]
    %v245 = vld [vmem:[%s7 + $0x8] sm:$0xff]
    %v246 = vadd.f32 %v233, %v244
    %v247 = vadd.f32 %v236, %v245
    %v248 = vadd.f32 %v239, %v244
    %v249 = vadd.f32 %v242, %v245
    %v250 = vmax.f32 %v246, 0.0
    %v251 = vmax.f32 %v247, 0.0
    %v252 = vmax.f32 %v248, 0.0
    %v253 = vmax.f32 %v249, 0.0
    %vm254 = vcmask 392192
    %v255 = vsel %vm254, %v250, 0.0
    %v256 = vsel %vm254, %v251, 0.0
    %v257 = vadd.f32 %v255, %v256
    %v258 = vrot.slane %v257, 4
    %v259 = vadd.f32 %v257, %v258
    %v260 = vrot.slane %v259, 2
    %v261 = vadd.f32 %v259, %v260
    %v262 = vrot.slane %v261, 1
    %v263 = vadd.f32 %v261, %v262
    %v264 = vsel %vm254, %v252, 0.0
    %v265 = vsel %vm254, %v253, 0.0
    %v266 = vadd.f32 %v264, %v265
    %v267 = vrot.slane %v266, 4
    %v268 = vadd.f32 %v266, %v267
    %v269 = vrot.slane %v268, 2
    %v270 = vadd.f32 %v268, %v269
    %v271 = vrot.slane %v270, 1
    %v272 = vadd.f32 %v270, %v271
    %v273 = vld [vmem:[%s8] sm:$0xff]
    %v274 = vld [vmem:[%s8 + $0x8] sm:$0xff]
    %v275 = vld [vmem:[%s8 + $0x10] sm:$0xff]
    %v276 = vld [vmem:[%s8 + $0x18] sm:$0xff]
    %v277 = vld [vmem:[%s8 + $0x20] sm:$0xff]
    %v278 = vld [vmem:[%s8 + $0x28] sm:$0xff]
    %v279 = vld [vmem:[%s9] sm:$0x1]
    %v281 = vperm.slane %v279, 0
    %vm285 = vcmask 1041409
    %v286 = vsel %vm285, %v272, %v263
    %v287 = vsel %vm254, %v286, 0
    %289 = vmatpush.msra.mxu0 0.0
    %290 = vmatpush.msra.mxu0 0.0
    %291 = vmatpush.msra.mxu0 0.0
    %292 = vmatpush.msra.mxu0 0.0
    %293 = vmatpush.msra.mxu0 0.0
    %294 = vmatpush.msra.mxu0 0.0
    %295 = vmatpush.msra.mxu0 0.0
    %296 = vmatpush.msra.mxu0 0.0
    %297 = vmatpush.msra.mxu0 0.0
    %298 = vmatpush.msra.mxu0 0.0
    %299 = vmatpush.msra.mxu0 %v278
    %300 = vmatpush.msra.mxu0 %v277
    %301 = vmatpush.msra.mxu0 %v276
    %302 = vmatpush.msra.mxu0 %v275
    %303 = vmatpush.msra.mxu0 %v274
    %304 = vmatpush.msra.mxu0 %v273
    %305 = vmatmul.f32.gmra.mxu0 %v287
    %v306 = vpop.f32.mrf.mxu0
    %v307 = vadd.f32 %v281, %v306
    %308 = vdwg.mxu0
    %vm309 = vcmask 58368
    %310 = vst.msk [vmem:[#allocation2] sm:$0x3] %vm309, %v307
    // Predicated region
    $region42: #{tpu_custom_call.1} parent=1 // pred_check
      _
    $region43: #{tpu_custom_call.1} parent=1 // pred_check_branch
      %312 = sbr.rel (0) target = $region45
    $region44: #{tpu_custom_call.1} parent=1 // pred_region
      %314 = vsyncadd [#allocation3], 0
      %s316 = sshll.u32 [#allocation2], 4
      %s317 = int_to_ptr.vmem [resolvable:$true] %s316
      %s318 = sshll.u32 %s10, 4
      %s319 = int_to_ptr.hbm [resolvable:$true] %s318
      %321 = dma.vmem_to_hbm [thread:$0]  %s317, 32, %s319, [#allocation3]
    $region45: #{tpu_custom_call.1} parent=1 // pred_fallthru
      _
    // Predicated region
    $region46: #{tpu_custom_call.1} parent=1 // pred_check
      _
    $region47: #{tpu_custom_call.1} parent=1 // pred_check_branch
      %323 = sbr.rel (0) target = $region49
    $region48: #{tpu_custom_call.1} parent=1 // pred_region
      %325 = dma.done [#allocation3], 32
    $region49: #{tpu_custom_call.1} parent=1 // pred_fallthru
      _
    %326 = vsyncpa [#allocation3], 1

</llo_original>
